<compile_context>
chip_gen: v6e
topology: v6e:2x2x1
jax: 0.10.0
libtpu: 0.0.40
codegen_flags: <defaults>
</compile_context>

<pallas_src>
import functools

import jax
import jax.numpy as jnp
from jax import lax
from jax.experimental import pallas as pl
from jax.experimental.pallas import tpu as pltpu


def _round_up(x: int, m: int) -> int:
    return (x + m - 1) // m * m


def _cdiv(a: int, b: int) -> int:
    return (a + b - 1) // b


def _softmax_topk_kernel(x_ref, w_ref, id_ref, *, top_k: int, approx_recip: bool):
    """One token tile, expert-major: x_ref is (E, TM); tokens live in lanes."""
    x = x_ref[...].astype(jnp.float32)                     # (E, TM)
    # numerically stable softmax over the expert (sublane) axis
    m = jnp.max(x, axis=0, keepdims=True)                  # (1, TM)
    e = jnp.exp(x - m)                                     # (E, TM), in (0, 1]
    denom = jnp.sum(e, axis=0, keepdims=True)              # (1, TM), >= 1
    # Deferred: applied only to the K extracted winners, not the full tile.
    inv = pl.reciprocal(denom, approx=approx_recip)        # (1, TM)

    E = e.shape[0]
    idx_bits = max(1, (E - 1).bit_length())
    idx_mask = (1 << idx_bits) - 1                         # static Python ints

    row = lax.broadcasted_iota(jnp.int32, e.shape, dimension=0)
    # e is non-negative finite f32 -> int32 bit-pattern order == float order.
    eb = pltpu.bitcast(e, jnp.int32)
    # One monotone key per element:
    #   [ exp bits with low idx_bits cleared | (idx_mask - expert_id) ]
    # Bigger exp (== bigger prob) wins; on (clipped-)equal values the lower
    # expert id wins, matching torch.topk / lax.top_k tie order.  Keys are
    # unique within a token column; relative weight error <= E * 2^-23.
    work = (eb & jnp.int32(~idx_mask)) | (jnp.int32(idx_mask) - row)

    for k in range(top_k):                                 # top_k is tiny: unrolled
        kmax = jnp.max(work, axis=0, keepdims=True)        # (1, TM) sublane reduce
        id_ref[pl.ds(k, 1), :] = jnp.int32(idx_mask) - (kmax & jnp.int32(idx_mask))
        w_ref[pl.ds(k, 1), :] = (
            pltpu.bitcast(kmax & jnp.int32(~idx_mask), jnp.float32) * inv)
        if k + 1 < top_k:
            # knock out the (unique) winner; -1 < every valid non-negative key
            work = jnp.where(work == kmax, jnp.int32(-1), work)


def _vmem_budget_and_limit() -> tuple:
    """Generation-gated VMEM budget (v5e/v6e: 128 MiB -> 64/96; v7x: 64 -> 32/48)."""
    cap = 64 * 1024 * 1024          # conservative fallback: v7x per-TC physical VMEM
    try:
        info = pltpu.get_tpu_info()
        v = getattr(info, "vmem_capacity_bytes", None)
        if isinstance(v, int) and v > 0:
            cap = v
    except Exception:
        pass
    return cap // 2, (cap * 3) // 4


def _min_grid_steps() -> int:
    """At least one token tile per TensorCore (v7x has 2); floor of 2 is ~free."""
    try:
        info = pltpu.get_tpu_info()
        for name in ("num_tensorcores", "tensorcore_count", "num_cores", "core_count"):
            v = getattr(info, name, None)
            if isinstance(v, int) and 1 <= v <= 16:
                return max(2, v)
    except Exception:
        pass
    return 2


def _pick_tm(requested_tm: int, n_tokens: int, n_experts: int, top_k: int,
             in_itemsize: int, budget_bytes: int, min_steps: int) -> int:
    # Tokens are the lane dim: the tile's last dim must be a multiple of 128 or
    # equal to the full token count.
    if n_tokens <= 128:
        return n_tokens
    tm = _round_up(min(max(requested_tm, 128), n_tokens), 128)
    # Ensure >= min_steps grid steps (dual-TC v7x; also enables pipelining).
    tm = min(tm, _round_up(_cdiv(n_tokens, min_steps), 128))
    # Per-token-column VMEM estimate, accounting for sublane padding and the
    # f32 upcast of the input tile (tokens/lanes are dense in this layout).
    e_sub = _round_up(n_experts, 8)
    k_sub = _round_up(top_k, 8)
    per_col = (2 * e_sub * in_itemsize      # double-buffered (E, tm) input block
               + 2 * k_sub * (4 + 4)        # double-buffered (K, tm) f32 + i32 outputs
               + 4 * e_sub * 4)             # x/e f32 + work/iota i32 temporaries
    while tm > 128 and tm * per_col > budget_bytes:
        tm = _round_up(tm // 2, 128)
    return tm


def softmax_topk(x: jax.Array, top_k: int, *, tm: int = 2048,
                 approx_recip: bool = True):
    """x: [num_tokens, num_experts] router logits (f32 or bf16).

    Returns (topk_weights f32[N, K], topk_ids i32[N, K]).
    """
    n_tokens, n_experts = x.shape
    assert 1 <= top_k <= n_experts, "top_k must be in [1, num_experts]"

    budget, limit = _vmem_budget_and_limit()
    tm = _pick_tm(tm, n_tokens, n_experts, top_k, x.dtype.itemsize, budget,
                  _min_grid_steps())
    grid = (pl.cdiv(n_tokens, tm),)

    # Expert-major input: tokens occupy the dense 128-wide lane dimension
    # in-kernel.  The XLA transpose is one cheap pass over the (small) logits;
    # the old token-major layout wasted up to 128/E of every vector op.
    xt = x.T                                                  # (E, N)

    kernel = functools.partial(_softmax_topk_kernel, top_k=top_k,
                               approx_recip=approx_recip)
    wt, idt = pl.pallas_call(
        kernel,
        out_shape=(
            jax.ShapeDtypeStruct((top_k, n_tokens), jnp.float32),
            jax.ShapeDtypeStruct((top_k, n_tokens), jnp.int32),
        ),
        grid=grid,
        in_specs=[pl.BlockSpec((n_experts, tm), lambda i: (0, i))],
        out_specs=(
            pl.BlockSpec((top_k, tm), lambda i: (0, i)),      # lane-dense outputs
            pl.BlockSpec((top_k, tm), lambda i: (0, i)),
        ),
        compiler_params=pltpu.CompilerParams(
            dimension_semantics=("parallel",),   # shards token tiles across TCs
            vmem_limit_bytes=limit,
        ),
    )(xt)

    # TODO(synk): MoE consumers that accept K-major (top_k, N) weights/ids can
    # use wt/idt directly and skip these (tiny, (N,K)-sized) transposes.
    return wt.T, idt.T


def _reference(x, top_k):
    probs = jax.nn.softmax(x.astype(jnp.float32), axis=-1)
    vals, ids = lax.top_k(probs, top_k)
    return vals, ids.astype(jnp.int32)


if __name__ == "__main__":
    key = jax.random.PRNGKey(0)
    configs = [
        (64, 8, 2),     # small MoE-router shape, single tile
        (50, 16, 4),    # non-multiple-of-8 token count, single tile
        (300, 8, 2),    # multi-step grid with a ragged final token tile
    ]
    for n_tokens, n_experts, top_k in configs:
        key, sub = jax.random.split(key)
        # bf16 logits (kernel upcasts to f32; halves HBM read traffic)
        x = jax.random.normal(sub, (n_tokens, n_experts),
                              dtype=jnp.float32).astype(jnp.bfloat16)
        w_ref, ids_ref = _reference(x, top_k)

        # default fast path (approx EUP reciprocal for the softmax denominator)
        w, ids = softmax_topk(x, top_k)
        jax.block_until_ready((w, ids))
        assert w.shape == (n_tokens, top_k) and ids.shape == (n_tokens, top_k)
        assert w.dtype == jnp.float32 and ids.dtype == jnp.int32
        assert jnp.array_equal(ids, ids_ref), "topk ids mismatch (approx path)"
        assert jnp.allclose(w, w_ref, atol=2e-3, rtol=2e-3), \
            "topk weights mismatch (approx path)"

        # near-exact path (exact divide; only the <=E-ulp packing bias remains)
        w2, ids2 = softmax_topk(x, top_k, approx_recip=False)
        jax.block_until_ready((w2, ids2))
        assert jnp.array_equal(ids2, ids_ref), "topk ids mismatch (exact path)"
        assert jnp.allclose(w2, w_ref, atol=4e-6, rtol=4e-6), \
            "topk weights mismatch (exact path)"

    print("KERNEL_OK")
</pallas_src>

<mosaic_0001>
module attributes {stable_mosaic.version = 11 : i64} {
  func.func @_softmax_topk_kernel(%arg0: i32, %arg1: memref<8x64xbf16, #tpu.memory_space<vmem>>, %arg2: memref<2x64xf32, #tpu.memory_space<vmem>>, %arg3: memref<2x64xi32, #tpu.memory_space<vmem>>) attributes {dimension_semantics = [#tpu.dimension_semantics<parallel>], iteration_bounds = array<i64: 1>, scalar_prefetch = 0 : i64, scratch_operands = 0 : i64, tpu.core_type = #tpu.core_type<tc>, window_params = [{transform_indices = @transform_0, window_bounds = array<i64: 8, 64>}, {transform_indices = @transform_1, window_bounds = array<i64: 2, 64>}, {transform_indices = @transform_2, window_bounds = array<i64: 2, 64>}]} {
    %c0 = arith.constant 0 : index
    %c0_0 = arith.constant 0 : index
    %0 = vector.load %arg1[%c0, %c0_0] : memref<8x64xbf16, #tpu.memory_space<vmem>>, vector<8x64xbf16>
    %1 = arith.extf %0 : vector<8x64xbf16> to vector<8x64xf32>
    %cst = arith.constant dense<0xFF800000> : vector<64xf32>
    %2 = vector.multi_reduction <maximumf>, %1, %cst [0] : vector<8x64xf32> to vector<64xf32>
    %3 = vector.shape_cast %2 : vector<64xf32> to vector<1x64xf32>
    %4 = vector.broadcast %3 : vector<1x64xf32> to vector<8x64xf32>
    %5 = arith.subf %1, %4 : vector<8x64xf32>
    %6 = math.exp %5 : vector<8x64xf32>
    %cst_1 = arith.constant dense<0.000000e+00> : vector<64xf32>
    %7 = vector.multi_reduction <add>, %6, %cst_1 [0] : vector<8x64xf32> to vector<64xf32>
    %8 = vector.shape_cast %7 : vector<64xf32> to vector<1x64xf32>
    %9 = tpu.reciprocal %8 {approx = true} : vector<1x64xf32> -> vector<1x64xf32>
    %10 = tpu.iota {dimensions = array<i32: 0>} : vector<8x64xi32>
    %11 = tpu.bitcast %6 : vector<8x64xf32> -> vector<8x64xi32>
    %c-8_i32 = arith.constant -8 : i32
    %12 = vector.broadcast %c-8_i32 : i32 to vector<8x64xi32>
    %13 = arith.andi %11, %12 : vector<8x64xi32>
    %c7_i32 = arith.constant 7 : i32
    %14 = vector.broadcast %c7_i32 : i32 to vector<8x64xi32>
    %15 = arith.subi %14, %10 : vector<8x64xi32>
    %16 = arith.ori %13, %15 : vector<8x64xi32>
    %cst_2 = arith.constant dense<-2147483648> : vector<64xi32>
    %17 = vector.multi_reduction <maxsi>, %16, %cst_2 [0] : vector<8x64xi32> to vector<64xi32>
    %18 = vector.shape_cast %17 : vector<64xi32> to vector<1x64xi32>
    %c7_i32_3 = arith.constant 7 : i32
    %19 = vector.broadcast %c7_i32_3 : i32 to vector<1x64xi32>
    %20 = arith.andi %18, %19 : vector<1x64xi32>
    %c7_i32_4 = arith.constant 7 : i32
    %21 = vector.broadcast %c7_i32_4 : i32 to vector<1x64xi32>
    %22 = arith.subi %21, %20 : vector<1x64xi32>
    %c0_5 = arith.constant 0 : index
    %c0_6 = arith.constant 0 : index
    %23 = vector.load %arg3[%c0_5, %c0_6] : memref<2x64xi32, #tpu.memory_space<vmem>>, vector<1x64xi32>
    tpu.vector_store %arg3[%c0_5, %c0_6], %22 {strides = array<i32>} : memref<2x64xi32, #tpu.memory_space<vmem>>, vector<1x64xi32>,
    %c-8_i32_7 = arith.constant -8 : i32
    %24 = vector.broadcast %c-8_i32_7 : i32 to vector<1x64xi32>
    %25 = arith.andi %18, %24 : vector<1x64xi32>
    %26 = tpu.bitcast %25 : vector<1x64xi32> -> vector<1x64xf32>
    %27 = arith.mulf %26, %9 : vector<1x64xf32>
    %c0_8 = arith.constant 0 : index
    %c0_9 = arith.constant 0 : index
    %28 = vector.load %arg2[%c0_8, %c0_9] : memref<2x64xf32, #tpu.memory_space<vmem>>, vector<1x64xf32>
    tpu.vector_store %arg2[%c0_8, %c0_9], %27 {strides = array<i32>} : memref<2x64xf32, #tpu.memory_space<vmem>>, vector<1x64xf32>,
    %29 = vector.broadcast %18 : vector<1x64xi32> to vector<8x64xi32>
    %30 = arith.cmpi eq, %16, %29 : vector<8x64xi32>
    %c-1_i32 = arith.constant -1 : i32
    %31 = vector.broadcast %c-1_i32 : i32 to vector<8x64xi32>
    %32 = arith.select %30, %31, %16 : vector<8x64xi1>, vector<8x64xi32>
    %cst_10 = arith.constant dense<-2147483648> : vector<64xi32>
    %33 = vector.multi_reduction <maxsi>, %32, %cst_10 [0] : vector<8x64xi32> to vector<64xi32>
    %34 = vector.shape_cast %33 : vector<64xi32> to vector<1x64xi32>
    %c7_i32_11 = arith.constant 7 : i32
    %35 = vector.broadcast %c7_i32_11 : i32 to vector<1x64xi32>
    %36 = arith.andi %34, %35 : vector<1x64xi32>
    %c7_i32_12 = arith.constant 7 : i32
    %37 = vector.broadcast %c7_i32_12 : i32 to vector<1x64xi32>
    %38 = arith.subi %37, %36 : vector<1x64xi32>
    %c1 = arith.constant 1 : index
    %c0_13 = arith.constant 0 : index
    %39 = vector.load %arg3[%c1, %c0_13] : memref<2x64xi32, #tpu.memory_space<vmem>>, vector<1x64xi32>
    tpu.vector_store %arg3[%c1, %c0_13], %38 {strides = array<i32>} : memref<2x64xi32, #tpu.memory_space<vmem>>, vector<1x64xi32>,
    %c-8_i32_14 = arith.constant -8 : i32
    %40 = vector.broadcast %c-8_i32_14 : i32 to vector<1x64xi32>
    %41 = arith.andi %34, %40 : vector<1x64xi32>
    %42 = tpu.bitcast %41 : vector<1x64xi32> -> vector<1x64xf32>
    %43 = arith.mulf %42, %9 : vector<1x64xf32>
    %c1_15 = arith.constant 1 : index
    %c0_16 = arith.constant 0 : index
    %44 = vector.load %arg2[%c1_15, %c0_16] : memref<2x64xf32, #tpu.memory_space<vmem>>, vector<1x64xf32>
    tpu.vector_store %arg2[%c1_15, %c0_16], %43 {strides = array<i32>} : memref<2x64xf32, #tpu.memory_space<vmem>>, vector<1x64xf32>,
    return
  }
  func.func @transform_0(%arg0: i32) -> (i32, i32) {
    %c0_i32 = arith.constant 0 : i32
    %c0_i32_0 = arith.constant 0 : i32
    return %c0_i32, %arg0 : i32, i32
  }
  func.func @transform_1(%arg0: i32) -> (i32, i32) {
    %c0_i32 = arith.constant 0 : i32
    %c0_i32_0 = arith.constant 0 : i32
    return %c0_i32, %arg0 : i32, i32
  }
  func.func @transform_2(%arg0: i32) -> (i32, i32) {
    %c0_i32 = arith.constant 0 : i32
    %c0_i32_0 = arith.constant 0 : i32
    return %c0_i32, %arg0 : i32, i32
  }
}

</mosaic_0001>

<llo_original>
// kernel: tpu_custom_call.1
$region0: #{tpu_custom_call.1}
  #allocation0 [shape = 'u32[]', space=smem, size = 0x4, offset = 0x4, fixed_abs, tag = 'smem constant byte address 0x4 - core index']
  #allocation1 [shape = 'u32[144,128]{1,0:T(1,128)}', space=vmem, size = 0x12000, scoped, tag = 'internal scratch']
  %s0 = inlined_call_operand.hbm [shape: bf16[8,64], index: 0, kind: input, shape index: {}]
  %s1 = inlined_call_operand.hbm [shape: f32[2,64], index: 1, kind: output, shape index: {0}]
  %s2 = inlined_call_operand.hbm [shape: s32[2,64], index: 2, kind: output, shape index: {1}]
  %3 = xla_tuple %s1, %s2
  %s4 = sld [smem:[#allocation0]]
  $region26: #{tpu_custom_call.1} parent=0
    _
  %s6 = ssub.s32 1, %s4
  %s7 = scalar_select 0, %s6, %s4
  $region1: #{tpu_custom_call.1} parent=0
    #allocation2 [shape = 'u8[2048]{0}', space=vmem, size = 0x800, scoped, tag = 'input window, operand 0, single buffered']
    #allocation3 [shape = 's32[1]{0}', space=sflag, size = 0x4, scoped, tag = 'scoped memory for tpu_custom_call.1']
    #allocation4 [shape = 's32[1]{0}', space=sflag, size = 0x4, scoped, tag = 'scoped memory for tpu_custom_call.1']
    #allocation5 [shape = 'u8[1024]{0}', space=vmem, size = 0x400, scoped, tag = 'output window, operand 0, single buffered']
    #allocation6 [shape = 'u8[1024]{0}', space=vmem, size = 0x400, scoped, tag = 'output window, operand 1, single buffered']
    #allocation7 [shape = 's32[1]{0}', space=sflag, size = 0x4, scoped, tag = 'scoped memory for tpu_custom_call.1']
    %8 = vsyncpa [#allocation3], 0
    %9 = vsyncpa [#allocation4], 0
    %10 = vsyncpa [#allocation7], 0
    // Predicated region
    $region2: #{tpu_custom_call.1} parent=1 // pred_check
      _
    $region3: #{tpu_custom_call.1} parent=1 // pred_check_branch
      %12 = sbr.rel (0) target = $region5
    $region4: #{tpu_custom_call.1} parent=1 // pred_region
      %s14 = ssub.s32 64, 64
      %15 = vsyncadd [#allocation3], %s14
      %s17 = sshll.u32 [#allocation2], 4
      %s18 = int_to_ptr.vmem [resolvable:$true] %s17
      %20 = dma.hbm_to_vmem [thread:$0]  %s0, 64, %s18, [#allocation3]
    $region5: #{tpu_custom_call.1} parent=1 // pred_fallthru
      _
    // Predicated region
    $region6: #{tpu_custom_call.1} parent=1 // pred_check
      _
    $region7: #{tpu_custom_call.1} parent=1 // pred_check_branch
      %22 = sbr.rel (0) target = $region9
    $region8: #{tpu_custom_call.1} parent=1 // pred_region
      %23 = dma.done [#allocation3], 64
    $region9: #{tpu_custom_call.1} parent=1 // pred_fallthru
      _
    %v24 = vld [vmem:[#allocation2] sm:$0xf]
    %v25 = vunpack.c.l.bf16 %v24
    %vm26 = vcmask 523264
    %v27 = vsel %vm26, %v25, -inf
    %v28 = vrot.slane %v27, 4
    %v29 = vmax.f32 %v27, %v28
    %v30 = vrot.slane %v29, 2
    %v31 = vmax.f32 %v29, %v30
    %v32 = vrot.slane %v31, 1
    %v33 = vmax.f32 %v31, %v32
    %v34 = vsub.f32 %v25, %v33
    %v35 = vmul.f32 %v34, 1.442695
    %v36 = vpow.pop %v35
    %v37 = vsel %vm26, %v36, 0.0
    %v38 = vrot.slane %v37, 4
    %v39 = vadd.f32 %v37, %v38
    %v40 = vrot.slane %v39, 2
    %v41 = vadd.f32 %v39, %v40
    %v42 = vrot.slane %v41, 1
    %v43 = vadd.f32 %v41, %v42
    %v44 = vrcp.pop %v43
    %v45 = vlaneseq
    %v46 = vshrl.u32 %v45, 7
    %v48 = vand.u32 %v36, 4294967288
    %v49 = vsub.s32 7, %v46
    %v50 = vor.u32 %v48, %v49
    %v51 = vsel %vm26, %v50, 2147483648
    %v52 = vrot.slane %v51, 4
    %vm53 = vcmp.gt.s32.totalorder %v51, %v52
    %v54 = vsel %vm53, %v51, %v52
    %v55 = vrot.slane %v54, 2
    %vm56 = vcmp.gt.s32.totalorder %v54, %v55
    %v57 = vsel %vm56, %v54, %v55
    %v58 = vrot.slane %v57, 1
    %vm59 = vcmp.gt.s32.totalorder %v57, %v58
    %v60 = vsel %vm59, %v57, %v58
    %v61 = vand.u32 %v60, 7
    %v62 = vsub.s32 7, %v61
    %vm63 = vcmask 516096
    %64 = vst.msk [vmem:[#allocation6] sm:$0x1] %vm63, %v62
    %v65 = vand.u32 %v60, 4294967288
    %v67 = vmul.f32 %v65, %v44
    %68 = vst.msk [vmem:[#allocation5] sm:$0x1] %vm63, %v67
    %vm69 = vcmp.eq.s32.totalorder %v50, %v60
    %v70 = vsel %vm69, 4294967295, %v50
    %v71 = vsel %vm26, %v70, 2147483648
    %v72 = vrot.slane %v71, 4
    %vm73 = vcmp.gt.s32.totalorder %v71, %v72
    %v74 = vsel %vm73, %v71, %v72
    %v75 = vrot.slane %v74, 2
    %vm76 = vcmp.gt.s32.totalorder %v74, %v75
    %v77 = vsel %vm76, %v74, %v75
    %v78 = vrot.slane %v77, 1
    %vm79 = vcmp.gt.s32.totalorder %v77, %v78
    %v80 = vsel %vm79, %v77, %v78
    %v81 = vand.u32 %v80, 7
    %v82 = vsub.s32 7, %v81
    %83 = vst.msk [vmem:[#allocation6 + $0x1] sm:$0x1] %vm63, %v82
    %v84 = vand.u32 %v80, 4294967288
    %v86 = vmul.f32 %v84, %v44
    %87 = vst.msk [vmem:[#allocation5 + $0x1] sm:$0x1] %vm63, %v86
    // Predicated region
    $region10: #{tpu_custom_call.1} parent=1 // pred_check
      _
    $region11: #{tpu_custom_call.1} parent=1 // pred_check_branch
      %89 = sbr.rel (0) target = $region13
    $region12: #{tpu_custom_call.1} parent=1 // pred_region
      %s91 = ssub.s32 32, 32
      %92 = vsyncadd [#allocation4], %s91
      %s94 = sshll.u32 [#allocation5], 4
      %s95 = int_to_ptr.vmem [resolvable:$true] %s94
      %97 = dma.vmem_to_hbm [thread:$0]  %s95, 32, %s1, [#allocation4]
    $region13: #{tpu_custom_call.1} parent=1 // pred_fallthru
      _
    // Predicated region
    $region14: #{tpu_custom_call.1} parent=1 // pred_check
      _
    $region15: #{tpu_custom_call.1} parent=1 // pred_check_branch
      %99 = sbr.rel (0) target = $region17
    $region16: #{tpu_custom_call.1} parent=1 // pred_region
      %s101 = ssub.s32 32, 32
      %102 = vsyncadd [#allocation7], %s101
      %s104 = sshll.u32 [#allocation6], 4
      %s105 = int_to_ptr.vmem [resolvable:$true] %s104
      %107 = dma.vmem_to_hbm [thread:$0]  %s105, 32, %s2, [#allocation7]
    $region17: #{tpu_custom_call.1} parent=1 // pred_fallthru
      _
    // Predicated region
    $region18: #{tpu_custom_call.1} parent=1 // pred_check
      _
    $region19: #{tpu_custom_call.1} parent=1 // pred_check_branch
      %109 = sbr.rel (0) target = $region21
    $region20: #{tpu_custom_call.1} parent=1 // pred_region
      %110 = dma.done [#allocation4], 32
    $region21: #{tpu_custom_call.1} parent=1 // pred_fallthru
      _
    // Predicated region
    $region22: #{tpu_custom_call.1} parent=1 // pred_check
      _
    $region23: #{tpu_custom_call.1} parent=1 // pred_check_branch
      %112 = sbr.rel (0) target = $region25
    $region24: #{tpu_custom_call.1} parent=1 // pred_region
      %113 = dma.done [#allocation7], 32
    $region25: #{tpu_custom_call.1} parent=1 // pred_fallthru
      _
    %114 = vsyncpa [#allocation3], 1
    %115 = vsyncpa [#allocation4], 1
    %116 = vsyncpa [#allocation7], 1

</llo_original>
